<compile_context>
chip_gen: v7x
topology: tpu7x:2x2x1
jax: 0.10.0
libtpu: 0.0.40
codegen_flags: <defaults>
</compile_context>

<pallas_src>
import jax
import jax.numpy as jnp
from jax.experimental import pallas as pl
from jax.experimental.pallas import tpu as pltpu

_LANES = 512                       # lane-dense slab width (multiple of 128)
_MAX_TILE_BYTES = 8 * 1024 * 1024  # per-buffer tile budget (8 MiB)
_VMEM_LIMIT_BYTES = 40 << 20       # in+out double-buffered (32 MiB) + headroom


def _round_up(a: int, b: int) -> int:
    return -(-a // b) * b


def _sigmoid_kernel(x_ref, o_ref):
    # HBM-bandwidth bound elementwise op; tanh goes to the EUP (free slot).
    x = x_ref[...].astype(jnp.float32)
    y = 0.5 * (jnp.tanh(0.5 * x) + 1.0)
    o_ref[...] = y.astype(o_ref.dtype)


def learn_relu_forward(x: jax.Array) -> jax.Array:
    """Pallas implementation of LearnRelu.forward (elementwise sigmoid).

    Accepts any rank/shape; flattens to a lane-dense 2D slab, tiles it over a
    pipelined 1D grid (ragged last block handled by Pallas), restores shape.
    """
    orig_shape = x.shape
    n = int(x.size)
    itemsize = jnp.dtype(x.dtype).itemsize
    # Sublane packing: 8 rows for 32-bit, 16 for 16-bit, 32 for 8-bit dtypes.
    sublane = max(8, 32 // itemsize)

    flat = x.reshape(-1)

    # Rows needed at _LANES per row, rounded only to the sublane multiple.
    rows = _round_up(max(pl.cdiv(n, _LANES), 1), sublane)
    padded_n = rows * _LANES
    needs_pad = padded_n > n
    if needs_pad:
        flat = jnp.pad(flat, (0, padded_n - n))
    x2d = flat.reshape(rows, _LANES)

    # Block rows from the VMEM tile budget (sublane-aligned), grid via cdiv so
    # we never round rows up to a full block.
    max_block_rows = max(sublane, (_MAX_TILE_BYTES // (_LANES * itemsize)) // sublane * sublane)
    block_rows = min(max_block_rows, rows)
    grid = (pl.cdiv(rows, block_rows),)

    out2d = pl.pallas_call(
        _sigmoid_kernel,
        out_shape=jax.ShapeDtypeStruct((rows, _LANES), x.dtype),
        grid=grid,
        in_specs=[pl.BlockSpec((block_rows, _LANES), lambda i: (i, 0))],
        out_specs=pl.BlockSpec((block_rows, _LANES), lambda i: (i, 0)),
        compiler_params=pltpu.CompilerParams(
            dimension_semantics=("parallel",),
            vmem_limit_bytes=_VMEM_LIMIT_BYTES,
        ),
    )(x2d)

    out_flat = out2d.reshape(-1)
    if needs_pad:
        out_flat = out_flat[:n]
    return out_flat.reshape(orig_shape)


if __name__ == "__main__":
    # 1) The literal tensor from the source file.
    x_literal = jnp.array([[1.0, -0.5], [-1.0, 3.0]], dtype=jnp.float32)

    # 2) Small random batch (NCHW-style) from PRNGKey(0).
    key = jax.random.PRNGKey(0)
    k1, k2, k3 = jax.random.split(key, 3)
    x_rand = jax.random.normal(k1, (2, 4, 16, 16), dtype=jnp.float32)

    # 3) A ragged shape to exercise the sublane-granularity pad/slice path.
    x_ragged = jax.random.normal(k2, (257, 130), dtype=jnp.float32)

    # 4) bf16 input to exercise the 16-row sublane packing path.
    x_bf16 = jax.random.normal(k3, (8, 33), dtype=jnp.bfloat16)

    y_literal = jax.block_until_ready(learn_relu_forward(x_literal))
    y_rand = jax.block_until_ready(learn_relu_forward(x_rand))
    y_ragged = jax.block_until_ready(learn_relu_forward(x_ragged))
    y_bf16 = jax.block_until_ready(learn_relu_forward(x_bf16))

    # Correctness checks against plain-JAX sigmoid.
    assert jnp.allclose(y_literal, jax.nn.sigmoid(x_literal), atol=1e-6), "literal mismatch"
    assert jnp.allclose(y_rand, jax.nn.sigmoid(x_rand), atol=1e-6), "random mismatch"
    assert jnp.allclose(y_ragged, jax.nn.sigmoid(x_ragged), atol=1e-6), "ragged mismatch"
    assert jnp.allclose(
        y_bf16.astype(jnp.float32),
        jax.nn.sigmoid(x_bf16.astype(jnp.float32)),
        atol=1e-2,
    ), "bf16 mismatch"
    assert y_rand.shape == x_rand.shape and y_ragged.shape == x_ragged.shape
    assert y_bf16.shape == x_bf16.shape and y_bf16.dtype == x_bf16.dtype

    print("KERNEL_OK")
</pallas_src>

<mosaic_0001>
module attributes {stable_mosaic.version = 11 : i64} {
  func.func @_sigmoid_kernel(%arg0: i32, %arg1: memref<8x512xf32, #tpu.memory_space<vmem>>, %arg2: memref<8x512xf32, #tpu.memory_space<vmem>>) attributes {dimension_semantics = [#tpu.dimension_semantics<parallel>], iteration_bounds = array<i64: 1>, scalar_prefetch = 0 : i64, scratch_operands = 0 : i64, tpu.core_type = #tpu.core_type<tc>, window_params = [{transform_indices = @transform_0, window_bounds = array<i64: 8, 512>}, {transform_indices = @transform_1, window_bounds = array<i64: 8, 512>}]} {
    %c0 = arith.constant 0 : index
    %c0_0 = arith.constant 0 : index
    %0 = vector.load %arg1[%c0, %c0_0] : memref<8x512xf32, #tpu.memory_space<vmem>>, vector<8x512xf32>
    %cst = arith.constant 5.000000e-01 : f32
    %1 = vector.broadcast %cst : f32 to vector<8x512xf32>
    %2 = arith.mulf %1, %0 : vector<8x512xf32>
    %3 = math.tanh %2 : vector<8x512xf32>
    %cst_1 = arith.constant 1.000000e+00 : f32
    %4 = vector.broadcast %cst_1 : f32 to vector<8x512xf32>
    %5 = arith.addf %3, %4 : vector<8x512xf32>
    %cst_2 = arith.constant 5.000000e-01 : f32
    %6 = vector.broadcast %cst_2 : f32 to vector<8x512xf32>
    %7 = arith.mulf %6, %5 : vector<8x512xf32>
    %c0_3 = arith.constant 0 : index
    %c0_4 = arith.constant 0 : index
    %8 = vector.load %arg2[%c0_3, %c0_4] : memref<8x512xf32, #tpu.memory_space<vmem>>, vector<8x512xf32>
    tpu.vector_store %arg2[%c0_3, %c0_4], %7 {strides = array<i32>} : memref<8x512xf32, #tpu.memory_space<vmem>>, vector<8x512xf32>,
    return
  }
  func.func @transform_0(%arg0: i32) -> (i32, i32) {
    %c0_i32 = arith.constant 0 : i32
    %c0_i32_0 = arith.constant 0 : i32
    return %arg0, %c0_i32 : i32, i32
  }
  func.func @transform_1(%arg0: i32) -> (i32, i32) {
    %c0_i32 = arith.constant 0 : i32
    %c0_i32_0 = arith.constant 0 : i32
    return %arg0, %c0_i32 : i32, i32
  }
}

</mosaic_0001>

<llo_original>
// kernel: tpu_custom_call.1
$region0: #{tpu_custom_call.1}
  #allocation0 [shape = 'u32[]', space=smem, size = 0x4, offset = 0x4, fixed_abs, tag = 'smem constant byte address 0x4 - core index']
  #allocation1 [shape = 'u32[144,128]{1,0:T(1,128)}', space=vmem, size = 0x12000, scoped, tag = 'internal scratch']
  %s0 = inlined_call_operand.hbm [shape: f32[8,512], index: 0, kind: input, shape index: {}]
  %s1 = inlined_call_operand.hbm [shape: f32[8,512], index: 1, kind: output, shape index: {}]
  %s2 = sld [smem:[#allocation0]]
  $region18: #{tpu_custom_call.1} parent=0
    _
  %s4 = ssub.s32 1, %s2
  %s5 = scalar_select 0, %s4, %s2
  $region1: #{tpu_custom_call.1} parent=0
    #allocation2 [shape = 'u8[16384]{0}', space=vmem, size = 0x4000, scoped, tag = 'input window, operand 0, single buffered']
    #allocation3 [shape = 's32[1]{0}', space=sflag, size = 0x4, scoped, tag = 'scoped memory for tpu_custom_call.1']
    #allocation4 [shape = 's32[1]{0}', space=sflag, size = 0x4, scoped, tag = 'scoped memory for tpu_custom_call.1']
    #allocation5 [shape = 'u8[16384]{0}', space=vmem, size = 0x4000, scoped, tag = 'output window, operand 0, single buffered']
    %6 = vsyncpa [#allocation3], 0
    %7 = vsyncpa [#allocation4], 0
    // Predicated region
    $region2: #{tpu_custom_call.1} parent=1 // pred_check
      _
    $region3: #{tpu_custom_call.1} parent=1 // pred_check_branch
      %9 = sbr.rel (0) target = $region5
    $region4: #{tpu_custom_call.1} parent=1 // pred_region
      %s11 = ssub.s32 512, 512
      %12 = vsyncadd [#allocation3], %s11
      %s14 = sshll.u32 [#allocation2], 4
      %s15 = int_to_ptr.vmem [resolvable:$true] %s14
      %17 = dma.hbm_to_vmem [thread:$0]  %s0, 512, %s15, [#allocation3]
    $region5: #{tpu_custom_call.1} parent=1 // pred_fallthru
      _
    // Predicated region
    $region6: #{tpu_custom_call.1} parent=1 // pred_check
      _
    $region7: #{tpu_custom_call.1} parent=1 // pred_check_branch
      %19 = sbr.rel (0) target = $region9
    $region8: #{tpu_custom_call.1} parent=1 // pred_region
      %20 = dma.done [#allocation3], 512
    $region9: #{tpu_custom_call.1} parent=1 // pred_fallthru
      _
    %v21 = vld [vmem:[#allocation2] sm:$0xff]
    %v22 = vld [vmem:[#allocation2 + $0x8] sm:$0xff]
    %v23 = vld [vmem:[#allocation2 + $0x10] sm:$0xff]
    %v24 = vld [vmem:[#allocation2 + $0x18] sm:$0xff]
    %v25 = vmul.f32 %v21, 0.5
    %v26 = vmul.f32 %v22, 0.5
    %v27 = vmul.f32 %v23, 0.5
    %v28 = vmul.f32 %v24, 0.5
    %v29 = vtanh.pop %v25
    %v30 = vtanh.pop %v26
    %v31 = vtanh.pop %v27
    %v32 = vtanh.pop %v28
    %v33 = vadd.f32 %v29, 1.0
    %v34 = vadd.f32 %v30, 1.0
    %v35 = vadd.f32 %v31, 1.0
    %v36 = vadd.f32 %v32, 1.0
    %v37 = vmul.f32 %v33, 0.5
    %v38 = vmul.f32 %v34, 0.5
    %v39 = vmul.f32 %v35, 0.5
    %v40 = vmul.f32 %v36, 0.5
    %41 = vst [vmem:[#allocation5] sm:$0xff] %v37
    %42 = vst [vmem:[#allocation5 + $0x8] sm:$0xff] %v38
    %43 = vst [vmem:[#allocation5 + $0x10] sm:$0xff] %v39
    %44 = vst [vmem:[#allocation5 + $0x18] sm:$0xff] %v40
    // Predicated region
    $region10: #{tpu_custom_call.1} parent=1 // pred_check
      _
    $region11: #{tpu_custom_call.1} parent=1 // pred_check_branch
      %46 = sbr.rel (0) target = $region13
    $region12: #{tpu_custom_call.1} parent=1 // pred_region
      %s48 = ssub.s32 512, 512
      %49 = vsyncadd [#allocation4], %s48
      %s51 = sshll.u32 [#allocation5], 4
      %s52 = int_to_ptr.vmem [resolvable:$true] %s51
      %54 = dma.vmem_to_hbm [thread:$0]  %s52, 512, %s1, [#allocation4]
    $region13: #{tpu_custom_call.1} parent=1 // pred_fallthru
      _
    // Predicated region
    $region14: #{tpu_custom_call.1} parent=1 // pred_check
      _
    $region15: #{tpu_custom_call.1} parent=1 // pred_check_branch
      %56 = sbr.rel (0) target = $region17
    $region16: #{tpu_custom_call.1} parent=1 // pred_region
      %57 = dma.done [#allocation4], 512
    $region17: #{tpu_custom_call.1} parent=1 // pred_fallthru
      _
    %58 = vsyncpa [#allocation3], 1
    %59 = vsyncpa [#allocation4], 1

</llo_original>
